<compile_context>
chip_gen: v6e
topology: v6e:2x2x1
jax: 0.10.0
libtpu: 0.0.40
codegen_flags: <defaults>
</compile_context>

<pallas_src>
import numpy as np
import jax
import jax.numpy as jnp
from jax.experimental import pallas as pl
from jax.experimental.pallas import tpu as pltpu

_LANE = 128
_SUBLANE = 8


# ----------------------------------------------------------------------------
# Kernel
# ----------------------------------------------------------------------------
def _patch_apply_kernel(img_idx_ref, is_first_ref, img_ref, adv_ref, msk_ref,
                        out_ref):
    # grid = (n_spatial_tiles, T); axis 1 (packed patches) is sequential.
    j = pl.program_id(1)
    first = is_first_ref[j] != 0     # first patch of its image (for this tile)

    # First patch of an image: initialize the resident out tile directly from
    # the original image tile, fused with the select (no copy-then-select).
    @pl.when(first)
    def _():
        out_ref[...] = jnp.where(msk_ref[...] < 0.5,
                                 img_ref[...],
                                 adv_ref[...].astype(out_ref.dtype))

    # Subsequent patches of the same image: accumulate into the resident tile.
    @pl.when(jnp.logical_not(first))
    def _():
        out_ref[...] = jnp.where(msk_ref[...] < 0.5,
                                 out_ref[...],
                                 adv_ref[...].astype(out_ref.dtype))


# ----------------------------------------------------------------------------
# Wrapper helpers
# ----------------------------------------------------------------------------
def _flat_shape(C, H, W):
    """Pick a pad-free per-image 2-D layout (R, L) (pure reshape, no copy)."""
    S = C * H * W
    if S % _LANE == 0:
        return S // _LANE, _LANE       # fully lane-dense, most rows to tile
    if (H * W) % _LANE == 0:
        return C, H * W                # lane dim multiple of 128
    if W % _LANE == 0:
        return C * H, W                # lane dim multiple of 128
    # Fallback: keep the minor dim full-extent in the BlockSpec.  Edge stores
    # are masked, but we avoid a full extra HBM pass from jnp.pad.
    return C * H, W


def _pick_tile_rows(R, L, itemsize, target_tile_bytes):
    """Rows per spatial tile: multiple of 8 dividing R when possible."""
    target_rows = max(_SUBLANE, target_tile_bytes // max(1, L * itemsize))
    if R <= target_rows:
        return R                       # single full-extent tile
    cand = (target_rows // _SUBLANE) * _SUBLANE
    while cand >= _SUBLANE:
        if R % cand == 0:
            return cand                # divides R -> no ragged trailing block
        cand -= _SUBLANE
    return max(_SUBLANE, (target_rows // _SUBLANE) * _SUBLANE)


def _tpu_tuning():
    """(target_tile_bytes_per_stream, vmem_limit_bytes), generation-gated."""
    try:
        vmem = int(pltpu.get_tpu_info().vmem_capacity_bytes)
    except Exception:
        vmem = 64 << 20                # conservative default (v7x-sized)
    if vmem >= (100 << 20):            # v5e / v6e: 128 MiB physical VMEM
        return 4 << 20, 64 << 20
    return 2 << 20, 32 << 20           # v7x: 64 MiB physical VMEM


# ----------------------------------------------------------------------------
# Public wrapper
# ----------------------------------------------------------------------------
def patch_applier(img_batch, target_lens, adv_batch, msk_batch,
                  *, target_tile_bytes=None, vmem_limit_bytes=None,
                  patch_buffering=None):
    """Pallas equivalent of PatchApplier.forward (returns a new array)."""
    B, C, H, W = img_batch.shape
    T = adv_batch.shape[0]
    if T == 0:                         # no patches at all -> identity
        return img_batch

    dtype = img_batch.dtype
    itemsize = jnp.dtype(dtype).itemsize

    if target_tile_bytes is None or vmem_limit_bytes is None:
        auto_tile, auto_vmem = _tpu_tuning()
        target_tile_bytes = auto_tile if target_tile_bytes is None else target_tile_bytes
        vmem_limit_bytes = auto_vmem if vmem_limit_bytes is None else vmem_limit_bytes

    # ---- pad-free flatten: (N, C, H, W) -> (N, R, L) -----------------------
    R, L = _flat_shape(C, H, W)
    img_f = img_batch.reshape(B, R, L)
    adv_f = adv_batch.reshape(T, R, L)
    msk_f = msk_batch.reshape(T, R, L)     # kept in caller's dtype (f32/bf16/u8)

    tile_r = _pick_tile_rows(R, L, itemsize, target_tile_bytes)
    n_tiles = -(-R // tile_r)

    # ---- scalar-prefetch metadata (per packed patch) ------------------------
    lens = target_lens.astype(jnp.int32)
    img_idx = jnp.repeat(jnp.arange(B, dtype=jnp.int32), lens,
                         total_repeat_length=T)
    is_first = jnp.concatenate(
        [jnp.ones((1,), jnp.int32),
         (img_idx[1:] != img_idx[:-1]).astype(jnp.int32)])

    # ---- BlockSpecs ----------------------------------------------------------
    # img / out follow the patch's image; adv / msk follow the packed patch.
    img_map = lambda t, j, img_idx, is_first: (img_idx[j], t, 0)
    patch_map = lambda t, j, img_idx, is_first: (j, t, 0)

    img_spec = pl.BlockSpec((1, tile_r, L), img_map)
    if patch_buffering is None:
        patch_spec = pl.BlockSpec((1, tile_r, L), patch_map)
    else:   # optional deeper buffering to sweep on v7x
        patch_spec = pl.BlockSpec((1, tile_r, L), patch_map,
                                  pipeline_mode=pl.Buffered(patch_buffering))

    out_f = pl.pallas_call(
        _patch_apply_kernel,
        out_shape=jax.ShapeDtypeStruct((B, R, L), dtype),
        grid_spec=pltpu.PrefetchScalarGridSpec(
            num_scalar_prefetch=2,          # img_idx, is_first -> SMEM
            grid=(n_tiles, T),              # patch axis last (sequential)
            in_specs=[img_spec, patch_spec, patch_spec],
            out_specs=img_spec,             # resident across a patch run
        ),
        # Alias the flattened img operand (flat input index 2: after the two
        # scalar-prefetch operands) to output 0: unvisited images/tiles keep
        # their original data and no second (B,R,L) HBM buffer is allocated.
        input_output_aliases={2: 0},
        compiler_params=pltpu.CompilerParams(
            dimension_semantics=("parallel", "arbitrary"),
            vmem_limit_bytes=vmem_limit_bytes,
        ),
    )(img_idx, is_first, img_f, adv_f, msk_f)

    return out_f.reshape(B, C, H, W)


# ----------------------------------------------------------------------------
# Reference + tests
# ----------------------------------------------------------------------------
def _reference(img, lens, adv, msk):
    """Direct NumPy transcription of the PyTorch loop."""
    img = np.asarray(img, dtype=np.float32).copy()
    adv = np.asarray(adv, dtype=np.float32)
    msk = np.asarray(msk).astype(np.float32)
    cumsum = 0
    for i in range(img.shape[0]):
        l = int(lens[i])
        for j in range(cumsum, cumsum + l):
            img[i] = np.where(msk[j] < 0.5, img[i], adv[j])
        cumsum += l
    return img


def _run_case(key, B, C, H, W, lens_np, msk_dtype=jnp.float32):
    k_img, k_adv, k_msk = jax.random.split(key, 3)
    T = int(lens_np.sum())
    target_lens = jnp.asarray(lens_np, dtype=jnp.int32)

    img_batch = jax.random.uniform(k_img, (B, C, H, W), dtype=jnp.float32)
    adv_batch = jax.random.uniform(k_adv, (T, C, H, W), dtype=jnp.float32)
    # Soft masks thresholded at 0.5 in-kernel; overlapping on purpose so the
    # sequential (later-patch-wins) ordering is exercised.
    msk_batch = jax.random.uniform(
        k_msk, (T, C, H, W), dtype=jnp.float32).astype(msk_dtype)

    out = patch_applier(img_batch, target_lens, adv_batch, msk_batch)
    out = jax.block_until_ready(out)

    ref = _reference(img_batch, lens_np, adv_batch, msk_batch)
    assert np.allclose(np.asarray(out, dtype=np.float32), ref, atol=1e-6), \
        "mismatch vs reference"


if __name__ == "__main__":
    key = jax.random.PRNGKey(0)
    k1, k2, k3 = jax.random.split(key, 3)

    # Case 1: S = 3*16*16 = 768 -> (6, 128) lane-dense layout, ragged lens.
    _run_case(k1, B=2, C=3, H=16, W=16, lens_np=np.array([3, 2], np.int32))

    # Case 2: S = 3*16*20 = 960 (no 128-factorization) -> pad-free fallback
    # layout (48, 20) with full-extent minor dim, plus a zero-patch image
    # (exercises the input/output aliasing preservation path).
    _run_case(k2, B=3, C=3, H=16, W=20, lens_np=np.array([2, 0, 3], np.int32))

    # Case 3: bf16 mask accepted directly (no wrapper-side cast), S = 1024.
    _run_case(k3, B=2, C=4, H=16, W=16, lens_np=np.array([1, 2], np.int32),
              msk_dtype=jnp.bfloat16)

    print("KERNEL_OK")
</pallas_src>

<mosaic_0001>
module attributes {stable_mosaic.version = 11 : i64} {
  func.func @_patch_apply_kernel(%arg0: i32, %arg1: i32, %arg2: memref<5xi32, #tpu.memory_space<smem>>, %arg3: memref<5xi32, #tpu.memory_space<smem>>, %arg4: memref<1x6x128xf32, #tpu.memory_space<vmem>>, %arg5: memref<1x6x128xf32, #tpu.memory_space<vmem>>, %arg6: memref<1x6x128xf32, #tpu.memory_space<vmem>>, %arg7: memref<1x6x128xf32, #tpu.memory_space<vmem>>) attributes {dimension_semantics = [#tpu.dimension_semantics<parallel>, #tpu.dimension_semantics<arbitrary>], iteration_bounds = array<i64: 1, 5>, scalar_prefetch = 2 : i64, scratch_operands = 0 : i64, tpu.core_type = #tpu.core_type<tc>, window_params = [{transform_indices = @transform_0, window_bounds = array<i64: 1, 6, 128>}, {transform_indices = @transform_1, window_bounds = array<i64: 1, 6, 128>}, {transform_indices = @transform_2, window_bounds = array<i64: 1, 6, 128>}, {transform_indices = @transform_3, window_bounds = array<i64: 1, 6, 128>}]} {
    %0 = arith.index_cast %arg1 : i32 to index
    %1 = memref.load %arg3[%0] : memref<5xi32, #tpu.memory_space<smem>>
    %c0_i32 = arith.constant 0 : i32
    %2 = arith.cmpi ne, %1, %c0_i32 : i32
    %3 = arith.extui %2 : i1 to i32
    %c0_i32_0 = arith.constant 0 : i32
    %4 = arith.cmpi ne, %3, %c0_i32_0 : i32
    scf.if %4 {
      %c0 = arith.constant 0 : index
      %c0_2 = arith.constant 0 : index
      %c0_3 = arith.constant 0 : index
      %8 = vector.load %arg6[%c0, %c0_2, %c0_3] : memref<1x6x128xf32, #tpu.memory_space<vmem>>, vector<1x6x128xf32>
      %cst = arith.constant 5.000000e-01 : f32
      %9 = vector.broadcast %cst : f32 to vector<1x6x128xf32>
      %10 = arith.cmpf olt, %8, %9 : vector<1x6x128xf32>
      %c0_4 = arith.constant 0 : index
      %c0_5 = arith.constant 0 : index
      %c0_6 = arith.constant 0 : index
      %11 = vector.load %arg4[%c0_4, %c0_5, %c0_6] : memref<1x6x128xf32, #tpu.memory_space<vmem>>, vector<1x6x128xf32>
      %c0_7 = arith.constant 0 : index
      %c0_8 = arith.constant 0 : index
      %c0_9 = arith.constant 0 : index
      %12 = vector.load %arg5[%c0_7, %c0_8, %c0_9] : memref<1x6x128xf32, #tpu.memory_space<vmem>>, vector<1x6x128xf32>
      %13 = arith.select %10, %11, %12 : vector<1x6x128xi1>, vector<1x6x128xf32>
      %c0_10 = arith.constant 0 : index
      %c0_11 = arith.constant 0 : index
      %c0_12 = arith.constant 0 : index
      %14 = vector.load %arg7[%c0_10, %c0_11, %c0_12] : memref<1x6x128xf32, #tpu.memory_space<vmem>>, vector<1x6x128xf32>
      tpu.vector_store %arg7[%c0_10, %c0_11, %c0_12], %13 {strides = array<i32>} : memref<1x6x128xf32, #tpu.memory_space<vmem>>, vector<1x6x128xf32>,
    } else {
    }
    %true = arith.constant true
    %5 = arith.xori %2, %true : i1
    %6 = arith.extui %5 : i1 to i32
    %c0_i32_1 = arith.constant 0 : i32
    %7 = arith.cmpi ne, %6, %c0_i32_1 : i32
    scf.if %7 {
      %c0 = arith.constant 0 : index
      %c0_2 = arith.constant 0 : index
      %c0_3 = arith.constant 0 : index
      %8 = vector.load %arg6[%c0, %c0_2, %c0_3] : memref<1x6x128xf32, #tpu.memory_space<vmem>>, vector<1x6x128xf32>
      %cst = arith.constant 5.000000e-01 : f32
      %9 = vector.broadcast %cst : f32 to vector<1x6x128xf32>
      %10 = arith.cmpf olt, %8, %9 : vector<1x6x128xf32>
      %c0_4 = arith.constant 0 : index
      %c0_5 = arith.constant 0 : index
      %c0_6 = arith.constant 0 : index
      %11 = vector.load %arg7[%c0_4, %c0_5, %c0_6] : memref<1x6x128xf32, #tpu.memory_space<vmem>>, vector<1x6x128xf32>
      %c0_7 = arith.constant 0 : index
      %c0_8 = arith.constant 0 : index
      %c0_9 = arith.constant 0 : index
      %12 = vector.load %arg5[%c0_7, %c0_8, %c0_9] : memref<1x6x128xf32, #tpu.memory_space<vmem>>, vector<1x6x128xf32>
      %13 = arith.select %10, %11, %12 : vector<1x6x128xi1>, vector<1x6x128xf32>
      %c0_10 = arith.constant 0 : index
      %c0_11 = arith.constant 0 : index
      %c0_12 = arith.constant 0 : index
      %14 = vector.load %arg7[%c0_10, %c0_11, %c0_12] : memref<1x6x128xf32, #tpu.memory_space<vmem>>, vector<1x6x128xf32>
      tpu.vector_store %arg7[%c0_10, %c0_11, %c0_12], %13 {strides = array<i32>} : memref<1x6x128xf32, #tpu.memory_space<vmem>>, vector<1x6x128xf32>,
    } else {
    }
    return
  }
  func.func @transform_0(%arg0: i32, %arg1: i32, %arg2: memref<5xi32, #tpu.memory_space<smem>>, %arg3: memref<5xi32, #tpu.memory_space<smem>>) -> (i32, i32, i32) {
    %0 = arith.index_cast %arg1 : i32 to index
    %1 = memref.load %arg2[%0] : memref<5xi32, #tpu.memory_space<smem>>
    %c0_i32 = arith.constant 0 : i32
    %c0_i32_0 = arith.constant 0 : i32
    return %1, %arg0, %c0_i32 : i32, i32, i32
  }
  func.func @transform_1(%arg0: i32, %arg1: i32, %arg2: memref<5xi32, #tpu.memory_space<smem>>, %arg3: memref<5xi32, #tpu.memory_space<smem>>) -> (i32, i32, i32) {
    %c0_i32 = arith.constant 0 : i32
    %c0_i32_0 = arith.constant 0 : i32
    return %arg1, %arg0, %c0_i32 : i32, i32, i32
  }
  func.func @transform_2(%arg0: i32, %arg1: i32, %arg2: memref<5xi32, #tpu.memory_space<smem>>, %arg3: memref<5xi32, #tpu.memory_space<smem>>) -> (i32, i32, i32) {
    %c0_i32 = arith.constant 0 : i32
    %c0_i32_0 = arith.constant 0 : i32
    return %arg1, %arg0, %c0_i32 : i32, i32, i32
  }
  func.func @transform_3(%arg0: i32, %arg1: i32, %arg2: memref<5xi32, #tpu.memory_space<smem>>, %arg3: memref<5xi32, #tpu.memory_space<smem>>) -> (i32, i32, i32) {
    %0 = arith.index_cast %arg1 : i32 to index
    %1 = memref.load %arg2[%0] : memref<5xi32, #tpu.memory_space<smem>>
    %c0_i32 = arith.constant 0 : i32
    %c0_i32_0 = arith.constant 0 : i32
    return %1, %arg0, %c0_i32 : i32, i32, i32
  }
}

</mosaic_0001>

<llo_original>
// kernel: tpu_custom_call.1
$region0: #{tpu_custom_call.1}
  #allocation0 [shape = 'u32[]', space=smem, size = 0x4, offset = 0x4, fixed_abs, tag = 'smem constant byte address 0x4 - core index']
  #allocation1 [shape = 'u32[144,128]{1,0:T(1,128)}', space=vmem, size = 0x12000, scoped, tag = 'internal scratch']
  #allocation2 [shape = 's32[1]{0}', space=sflag, size = 0x4, scoped, tag = 'scoped memory for tpu_custom_call.1']
  #allocation3 [shape = 'u8[512]{0}', space=smem, size = 0x200, scoped, tag = 'prefetched SMEM operand 0']
  #allocation4 [shape = 'u8[512]{0}', space=smem, size = 0x200, scoped, tag = 'prefetched SMEM operand 1']
  %s0 = inlined_call_operand.vmem [shape: s32[5], index: 0, kind: input, shape index: {}]
  %s1 = inlined_call_operand.vmem [shape: s32[5], index: 1, kind: input, shape index: {}]
  %s2 = inlined_call_operand.vmem [shape: f32[2,6,128], index: 2, kind: input, shape index: {}, may-alias: {2,5}]
  %s3 = inlined_call_operand.hbm [shape: f32[5,6,128], index: 3, kind: input, shape index: {}]
  %s4 = inlined_call_operand.hbm [shape: f32[5,6,128], index: 4, kind: input, shape index: {}]
  %s5 = inlined_call_operand.vmem [shape: f32[2,6,128], index: 5, kind: output, shape index: {}, may-alias: {2,5}]
  %s6 = sld [smem:[#allocation0]]
  $region61: #{tpu_custom_call.1} parent=0
    _
  %s8 = ssub.s32 1, %s6
  %s9 = scalar_select 0, %s8, %s6
  %s10 = sshll.u32 %s0, 4
  %s11 = int_to_ptr.vmem [resolvable:$true] %s10
  %13 = dma.vmem_to_smem %s11, 16, [#allocation3], [#allocation2]
  %s14 = sshll.u32 %s1, 4
  %s15 = int_to_ptr.vmem [resolvable:$true] %s14
  %17 = dma.vmem_to_smem %s15, 16, [#allocation4], [#allocation2]
  %18 = dma.done [#allocation2], 32
  %19 = sfence
  $region1: #{tpu_custom_call.1} parent=0
    #allocation5 [shape = 'u8[8192]{0}', space=vmem, size = 0x2000, scoped, tag = 'input window, operand 3']
    #allocation6 [shape = 's32[2]{0}', space=sflag, size = 0x8, scoped, tag = 'scoped memory for tpu_custom_call.1']
    #allocation7 [shape = 'u8[8192]{0}', space=vmem, size = 0x2000, scoped, tag = 'input window, operand 4']
    #allocation8 [shape = 's32[2]{0}', space=sflag, size = 0x8, scoped, tag = 'scoped memory for tpu_custom_call.1']
    %20 = vsyncpa [#allocation6], 0
    %s21 = scalar_lea.sflag [#allocation6], 1
    %22 = vsyncpa %s21, 0
    %23 = vsyncpa [#allocation8], 0
    %s24 = scalar_lea.sflag [#allocation8], 1
    %25 = vsyncpa %s24, 0
    loop: start=0, step=1, limit=7
    $region2: #{tpu_custom_call.1} parent=1 // loop_pre_header
      _
    $region3: #{tpu_custom_call.1} parent=1 // loop_header
      %s27 = sphi 0, %s31
      %p28 = scmp.ge.s32.totalorder %s27, 7
      %s34 = sphi 0, %s46
      %s35 = sphi 0, %s42
      %s36 = sphi 0, %s34
      %s37 = sphi 0, %s35
      %s38 = sphi 0, %s36
      %s39 = sphi 0, %s37
      %s53 = sphi 0, %s55
      %s56 = sphi 0, %s53
      %s57 = sphi 0, %s56
      %s73 = sphi 0, %s57
      %s81 = sphi 0, %s83
      %s84 = sphi 0, %s81
      %s85 = sphi 0, %s84
      %s101 = sphi 0, %s85
      %s109 = sphi 0, %s111
      %s112 = sphi 0, %s109
      %s113 = sphi 0, %s112
      %s129 = sphi 0, %s113
      %s139 = sphi 0, %s141
      %s142 = sphi 0, %s139
      %s143 = sphi 0, %s142
      %s159 = sphi 0, %s143
    $region4: #{tpu_custom_call.1} parent=1 // loop_header_branch
      %30 = sbr.rel (%p28) target = $region8
    $region5: #{tpu_custom_call.1} parent=1 // loop_body
      %s32 = ssub.s32 %s27, 1
      %s33 = ssub.s32 %s27, 2
      %s40 = sadd.s32 1, %s35
      %p41 = scmp.ge.s32.totalorder %s40, 5
      %s42 = scalar_select %p41, 0, %s40
      %s43 = sadd.s32 1, %s34
      %s44 = scalar_select %p41, %s43, %s34
      %p45 = scmp.ge.s32.totalorder %s44, 1
      %s46 = scalar_select %p45, 0, %s44
      %s47 = sld [smem:[#allocation3 + %s35]]
      %s48 = sld [smem:[#allocation3 + %s42]]
      %s49 = ssub.s32 %s47, %s48
      %s50 = ssub.s32 %s34, %s46
      %s51 = sor.u32 %s49, %s50
      %p52 = scmp.eq.s32.totalorder %s51, 0
      %s54 = sadd.s32 %s53, 1
      %s55 = scalar_select %p52, %s53, %s54
      %p58 = pneg %p52
      %p59 = scmp.eq.s32.totalorder %s27, 4
      %p60 = por %p58, %p59
      %p61 = scmp.ne.s32.totalorder %s53, %s56
      %p62 = scmp.eq.s32.totalorder %s27, 0
      %p63 = por %p61, %p62
      %p64 = scmp.ne.s32.totalorder %s53, %s56
      %p65 = scmp.eq.s32.totalorder %s32, 4
      %p66 = por %p64, %p65
      %p67 = scmp.ne.s32.totalorder %s56, %s57
      %p68 = scmp.eq.s32.totalorder %s32, 0
      %p69 = por %p67, %p68
      %p70 = scmp.ne.s32.totalorder %s56, %s57
      %p71 = scmp.eq.s32.totalorder %s33, 4
      %p72 = por %p70, %p71
      %p74 = scmp.ne.s32.totalorder %s57, %s73
      %p75 = scmp.eq.s32.totalorder %s33, 0
      %p76 = por %p74, %p75
      %s77 = ssub.s32 %s35, %s42
      %s78 = ssub.s32 %s34, %s46
      %s79 = sor.u32 %s77, %s78
      %p80 = scmp.eq.s32.totalorder %s79, 0
      %s82 = sadd.s32 %s81, 1
      %s83 = scalar_select %p80, %s81, %s82
      %p86 = pneg %p80
      %p87 = scmp.eq.s32.totalorder %s27, 4
      %p88 = por %p86, %p87
      %p89 = scmp.ne.s32.totalorder %s81, %s84
      %p90 = scmp.eq.s32.totalorder %s27, 0
      %p91 = por %p89, %p90
      %p92 = scmp.ne.s32.totalorder %s81, %s84
      %p93 = scmp.eq.s32.totalorder %s32, 4
      %p94 = por %p92, %p93
      %p95 = scmp.ne.s32.totalorder %s84, %s85
      %p96 = scmp.eq.s32.totalorder %s32, 0
      %p97 = por %p95, %p96
      %p98 = scmp.ne.s32.totalorder %s84, %s85
      %p99 = scmp.eq.s32.totalorder %s33, 4
      %p100 = por %p98, %p99
      %p102 = scmp.ne.s32.totalorder %s85, %s101
      %p103 = scmp.eq.s32.totalorder %s33, 0
      %p104 = por %p102, %p103
      %s105 = ssub.s32 %s35, %s42
      %s106 = ssub.s32 %s34, %s46
      %s107 = sor.u32 %s105, %s106
      %p108 = scmp.eq.s32.totalorder %s107, 0
      %s110 = sadd.s32 %s109, 1
      %s111 = scalar_select %p108, %s109, %s110
      %p114 = pneg %p108
      %p115 = scmp.eq.s32.totalorder %s27, 4
      %p116 = por %p114, %p115
      %p117 = scmp.ne.s32.totalorder %s109, %s112
      %p118 = scmp.eq.s32.totalorder %s27, 0
      %p119 = por %p117, %p118
      %p120 = scmp.ne.s32.totalorder %s109, %s112
      %p121 = scmp.eq.s32.totalorder %s32, 4
      %p122 = por %p120, %p121
      %p123 = scmp.ne.s32.totalorder %s112, %s113
      %p124 = scmp.eq.s32.totalorder %s32, 0
      %p125 = por %p123, %p124
      %p126 = scmp.ne.s32.totalorder %s112, %s113
      %p127 = scmp.eq.s32.totalorder %s33, 4
      %p128 = por %p126, %p127
      %p130 = scmp.ne.s32.totalorder %s113, %s129
      %p131 = scmp.eq.s32.totalorder %s33, 0
      %p132 = por %p130, %p131
      %s133 = sld [smem:[#allocation3 + %s35]]
      %s134 = sld [smem:[#allocation3 + %s42]]
      %s135 = ssub.s32 %s133, %s134
      %s136 = ssub.s32 %s34, %s46
      %s137 = sor.u32 %s135, %s136
      %p138 = scmp.eq.s32.totalorder %s137, 0
      %s140 = sadd.s32 %s139, 1
      %s141 = scalar_select %p138, %s139, %s140
      %p144 = pneg %p138
      %p145 = scmp.eq.s32.totalorder %s27, 4
      %p146 = por %p144, %p145
      %p147 = scmp.ne.s32.totalorder %s139, %s142
      %p148 = scmp.eq.s32.totalorder %s27, 0
      %p149 = por %p147, %p148
      %p150 = scmp.ne.s32.totalorder %s139, %s142
      %p151 = scmp.eq.s32.totalorder %s32, 4
      %p152 = por %p150, %p151
      %p153 = scmp.ne.s32.totalorder %s142, %s143
      %p154 = scmp.eq.s32.totalorder %s32, 0
      %p155 = por %p153, %p154
      %p156 = scmp.ne.s32.totalorder %s142, %s143
      %p157 = scmp.eq.s32.totalorder %s33, 4
      %p158 = por %p156, %p157
      %p160 = scmp.ne.s32.totalorder %s143, %s159
      %p161 = scmp.eq.s32.totalorder %s33, 0
      %p162 = por %p160, %p161
      %p163 = scmp.le.s32.totalorder 1, %s27
      %p164 = scmp.lt.s32.totalorder %s27, 6
      %p165 = pnand %p163, %p164
      %p166 = pneg %p165
      // Predicated region
      $region9: #{tpu_custom_call.1} parent=5 // pred_check
        _
      $region10: #{tpu_custom_call.1} parent=5 // pred_check_branch
        %168 = sbr.rel (%p165) target = $region12
      $region11: #{tpu_custom_call.1} parent=5 // pred_region
        %s169 = ssub.s32 %s27, 1
      $region12: #{tpu_custom_call.1} parent=5 // pred_fallthru
        _
      %p170 = scmp.lt.s32.totalorder %s27, 5
      // Predicated region
      $region13: #{tpu_custom_call.1} parent=5 // pred_check
        %p171 = pneg %p170
      $region14: #{tpu_custom_call.1} parent=5 // pred_check_branch
        %173 = sbr.rel (%p171) target = $region16
      $region15: #{tpu_custom_call.1} parent=5 // pred_region
        // Predicated region
        $region17: #{tpu_custom_call.1} parent=15 // pred_check
          %p174 = pneg %p63
        $region18: #{tpu_custom_call.1} parent=15 // pred_check_branch
          %176 = sbr.rel (%p174) target = $region20
        $region19: #{tpu_custom_call.1} parent=15 // pred_region
          %s177 = sld [smem:[#allocation3 + %s35]]
          %p178 = scmp.lt.s32.totalorder %s177, 1
          %s179 = scalar_select %p178, %s177, 1
          %p180 = scmp.lt.s32.totalorder %s34, 0
          %s181 = scalar_select %p180, %s34, 0
          %s182 = sadd.s32 %s181, %s179
          %s183 = smul.addr %s182, 8
          %s184 = scalar_lea.vmem %s2, %s183
          %s185 = sld [smem:[#allocation3 + %s35]]
        $region20: #{tpu_custom_call.1} parent=15 // pred_fallthru
          _
        // Predicated region
        $region21: #{tpu_custom_call.1} parent=15 // pred_check
          %p186 = pneg %p91
        $region22: #{tpu_custom_call.1} parent=15 // pred_check_branch
          %188 = sbr.rel (%p186) target = $region24
        $region23: #{tpu_custom_call.1} parent=15 // pred_region
          %s189 = sand.u32 %s81, 1
          %s190 = scalar_lea.sflag [#allocation6], %s189
          %s191 = sand.u32 %s81, 1
          %s192 = smul.addr %s191, 8
          %s193 = scalar_lea.vmem [#allocation5], %s192
          %s195 = ssub.s32 128, 128
          %196 = vsyncadd %s190, %s195
          %s197 = sadd.s32 %s34, %s35
          %s198 = smul.addr %s197, 128
          %s199 = scalar_lea.hbm %s3, %s198
          %s201 = sshll.u32 %s193, 4
          %s202 = int_to_ptr.vmem [resolvable:$true] %s201
          %204 = dma.hbm_to_vmem [thread:$0]  %s199, 128, %s202, %s190
        $region24: #{tpu_custom_call.1} parent=15 // pred_fallthru
          _
        // Predicated region
        $region25: #{tpu_custom_call.1} parent=15 // pred_check
          %p205 = pneg %p119
        $region26: #{tpu_custom_call.1} parent=15 // pred_check_branch
          %207 = sbr.rel (%p205) target = $region28
        $region27: #{tpu_custom_call.1} parent=15 // pred_region
          %s208 = sand.u32 %s109, 1
          %s209 = scalar_lea.sflag [#allocation8], %s208
          %s210 = sand.u32 %s109, 1
          %s211 = smul.addr %s210, 8
          %s212 = scalar_lea.vmem [#allocation7], %s211
          %s214 = ssub.s32 128, 128
          %215 = vsyncadd %s209, %s214
          %s216 = sadd.s32 %s34, %s35
          %s217 = smul.addr %s216, 128
          %s218 = scalar_lea.hbm %s4, %s217
          %s220 = sshll.u32 %s212, 4
          %s221 = int_to_ptr.vmem [resolvable:$true] %s220
          %223 = dma.hbm_to_vmem [thread:$0]  %s218, 128, %s221, %s209
        $region28: #{tpu_custom_call.1} parent=15 // pred_fallthru
          _
      $region16: #{tpu_custom_call.1} parent=5 // pred_fallthru
        _
      %p224 = scmp.le.s32.totalorder 1, %s27
      %p225 = scmp.lt.s32.totalorder %s27, 6
      %p226 = pnand %p224, %p225
      %p227 = pneg %p226
      // Predicated region
      $region29: #{tpu_custom_call.1} parent=5 // pred_check
        _
      $region30: #{tpu_custom_call.1} parent=5 // pred_check_branch
        %229 = sbr.rel (%p226) target = $region32
      $region31: #{tpu_custom_call.1} parent=5 // pred_region
        %s230 = ssub.s32 %s27, 1
        %s231 = sand.u32 %s84, 1
        %s232 = scalar_lea.sflag [#allocation6], %s231
        %s233 = sand.u32 %s84, 1
        %s234 = smul.addr %s233, 8
        %s235 = scalar_lea.vmem [#allocation5], %s234
        // Predicated region
        $region33: #{tpu_custom_call.1} parent=31 // pred_check
          %p236 = pneg %p97
        $region34: #{tpu_custom_call.1} parent=31 // pred_check_branch
          %238 = sbr.rel (%p236) target = $region36
        $region35: #{tpu_custom_call.1} parent=31 // pred_region
          %239 = dma.done %s232, 128
        $region36: #{tpu_custom_call.1} parent=31 // pred_fallthru
          _
        %s240 = sand.u32 %s112, 1
        %s241 = scalar_lea.sflag [#allocation8], %s240
        %s242 = sand.u32 %s112, 1
        %s243 = smul.addr %s242, 8
        %s244 = scalar_lea.vmem [#allocation7], %s243
        // Predicated region
        $region37: #{tpu_custom_call.1} parent=31 // pred_check
          %p245 = pneg %p125
        $region38: #{tpu_custom_call.1} parent=31 // pred_check_branch
          %247 = sbr.rel (%p245) target = $region40
        $region39: #{tpu_custom_call.1} parent=31 // pred_region
          %248 = dma.done %s241, 128
        $region40: #{tpu_custom_call.1} parent=31 // pred_fallthru
          _
        %s249 = sld [smem:[#allocation3 + %s37]]
        %p250 = scmp.lt.s32.totalorder %s249, 1
        %s251 = scalar_select %p250, %s249, 1
        %p252 = scmp.lt.s32.totalorder %s36, 0
        %s253 = scalar_select %p252, %s36, 0
        %s254 = sadd.s32 %s253, %s251
        %s255 = smul.addr %s254, 8
        %s256 = scalar_lea.vmem %s2, %s255
        %p257 = pneg %p69
        %p258 = pneg %p66
        %s259 = sand.u32 %s84, 1
        %s260 = scalar_lea.sflag [#allocation6], %s259
        %s261 = sand.u32 %s84, 1
        %s262 = smul.addr %s261, 8
        %s263 = scalar_lea.vmem [#allocation5], %s262
        %p264 = pneg %p97
        %p265 = pneg %p94
        %s266 = sand.u32 %s112, 1
        %s267 = scalar_lea.sflag [#allocation8], %s266
        %s268 = sand.u32 %s112, 1
        %s269 = smul.addr %s268, 8
        %s270 = scalar_lea.vmem [#allocation7], %s269
        %p271 = pneg %p125
        %p272 = pneg %p122
        %p273 = pneg %p155
        %p274 = pneg %p152
        %s275 = sld [smem:[#allocation3 + %s37]]
        %p276 = scmp.lt.s32.totalorder %s275, 1
        %s277 = scalar_select %p276, %s275, 1
        %p278 = scmp.lt.s32.totalorder %s36, 0
        %s279 = scalar_select %p278, %s36, 0
        %s280 = sadd.s32 %s279, %s277
        %s281 = smul.addr %s280, 8
        %s282 = scalar_lea.vmem %s5, %s281
        %s283 = sld [smem:[#allocation3 + %s37]]
        %p284 = scmp.lt.s32.totalorder %s283, 1
        %s285 = scalar_select %p284, %s283, 1
        %p286 = scmp.lt.s32.totalorder %s36, 0
        %s287 = scalar_select %p286, %s36, 0
        %s288 = sadd.s32 %s287, %s285
        %s289 = smul.addr %s288, 8
        %s290 = scalar_lea.vmem %s2, %s289
        %s291 = sld [smem:[#allocation3 + %s37]]
        %s292 = sld [smem:[#allocation3 + %s37]]
        %p293 = scmp.lt.s32.totalorder %s292, 1
        %s294 = scalar_select %p293, %s292, 1
        %p295 = scmp.lt.s32.totalorder %s36, 0
        %s296 = scalar_select %p295, %s36, 0
        %s297 = sadd.s32 %s296, %s294
        %s298 = smul.addr %s297, 8
        %s299 = scalar_lea.vmem %s5, %s298
        %s300 = sld [smem:[#allocation3 + %s37]]
        %s301 = sld [smem:[#allocation4 + %s37]]
        %p302 = scmp.ne.s32.totalorder %s301, 0
        // Predicated region
        $region41: #{tpu_custom_call.1} parent=31 // pred_check
          %p303 = pneg %p302
        $region42: #{tpu_custom_call.1} parent=31 // pred_check_branch
          %305 = sbr.rel (%p303) target = $region44
        $region43: #{tpu_custom_call.1} parent=31 // pred_region
          %v306 = vld [vmem:[%s244] sm:$0x3f]
          %vm307 = vcmp.lt.f32.partialorder %v306, 0.5
          %v308 = vld [vmem:[%s290] sm:$0x3f]
          %v309 = vld [vmem:[%s235] sm:$0x3f]
          %v310 = vsel %vm307, %v308, %v309
          %311 = vst [vmem:[%s299] sm:$0x3f] %v310
        $region44: #{tpu_custom_call.1} parent=31 // pred_fallthru
          _
        %p312 = scmp.eq.s32.totalorder %s301, 0
        // Predicated region
        $region45: #{tpu_custom_call.1} parent=31 // pred_check
          %p313 = pneg %p312
        $region46: #{tpu_custom_call.1} parent=31 // pred_check_branch
          %315 = sbr.rel (%p313) target = $region48
        $region47: #{tpu_custom_call.1} parent=31 // pred_region
          %v316 = vld [vmem:[%s244] sm:$0x3f]
          %vm317 = vcmp.lt.f32.partialorder %v316, 0.5
          %v318 = vld [vmem:[%s299] sm:$0x3f]
          %v319 = vld [vmem:[%s235] sm:$0x3f]
          %v320 = vsel %vm317, %v318, %v319
          %321 = vst [vmem:[%s299] sm:$0x3f] %v320
        $region48: #{tpu_custom_call.1} parent=31 // pred_fallthru
          _
        %s322 = sld [smem:[#allocation3 + %s37]]
        %p323 = scmp.lt.s32.totalorder %s322, 1
        %s324 = scalar_select %p323, %s322, 1
        %p325 = scmp.lt.s32.totalorder %s36, 0
        %s326 = scalar_select %p325, %s36, 0
        %s327 = sadd.s32 %s326, %s324
        %s328 = smul.addr %s327, 8
        %s329 = scalar_lea.vmem %s5, %s328
        // Predicated region
        $region49: #{tpu_custom_call.1} parent=31 // pred_check
          %p330 = pneg %p152
        $region50: #{tpu_custom_call.1} parent=31 // pred_check_branch
          %332 = sbr.rel (%p330) target = $region52
        $region51: #{tpu_custom_call.1} parent=31 // pred_region
          %s333 = sld [smem:[#allocation3 + %s37]]
        $region52: #{tpu_custom_call.1} parent=31 // pred_fallthru
          _
      $region32: #{tpu_custom_call.1} parent=5 // pred_fallthru
        _
      %p334 = scmp.le.s32.totalorder 2, %s27
      // Predicated region
      $region53: #{tpu_custom_call.1} parent=5 // pred_check
        %p335 = pneg %p334
      $region54: #{tpu_custom_call.1} parent=5 // pred_check_branch
        %337 = sbr.rel (%p335) target = $region56
      $region55: #{tpu_custom_call.1} parent=5 // pred_region
        %s338 = ssub.s32 %s27, 2
        // Predicated region
        $region57: #{tpu_custom_call.1} parent=55 // pred_check
          %p339 = pneg %p158
        $region58: #{tpu_custom_call.1} parent=55 // pred_check_branch
          %341 = sbr.rel (%p339) target = $region60
        $region59: #{tpu_custom_call.1} parent=55 // pred_region
          %s342 = sld [smem:[#allocation3 + %s39]]
          %p343 = scmp.lt.s32.totalorder %s342, 1
          %s344 = scalar_select %p343, %s342, 1
          %p345 = scmp.lt.s32.totalorder %s38, 0
          %s346 = scalar_select %p345, %s38, 0
          %s347 = sadd.s32 %s346, %s344
          %s348 = smul.addr %s347, 8
          %s349 = scalar_lea.vmem %s5, %s348
        $region60: #{tpu_custom_call.1} parent=55 // pred_fallthru
          _
      $region56: #{tpu_custom_call.1} parent=5 // pred_fallthru
        _
    $region6: #{tpu_custom_call.1} parent=1 // loop_footer
      %s31 = sadd.s32 1, %s27
    $region7: #{tpu_custom_call.1} parent=1 // loop_footer_branch
      %26 = sbr.rel target = $region3
    $region8: #{tpu_custom_call.1} parent=1 // loop_exit
      _
    %350 = vsyncpa [#allocation6], 1
    %s351 = scalar_lea.sflag [#allocation6], 1
    %352 = vsyncpa %s351, 1
    %353 = vsyncpa [#allocation8], 1
    %s354 = scalar_lea.sflag [#allocation8], 1
    %355 = vsyncpa %s354, 1

</llo_original>
